<compile_context>
chip_gen: v7x
topology: tpu7x:2x2x1
jax: 0.10.0
libtpu: 0.0.40
codegen_flags: <defaults>
</compile_context>

<pallas_src>
import jax
import jax.numpy as jnp
from jax.experimental import pallas as pl
from jax.experimental.pallas import tpu as pltpu


def ae_kernel(x_ref,
              w1_ref, b1_ref,   # encoder.0: code   -> hidden
              w2_ref, b2_ref,   # encoder.2: hidden -> embed
              w3_ref, b3_ref,   # decoder.0: embed  -> hidden
              w4_ref, b4_ref,   # decoder.2: hidden -> code
              rec_ref, lat_ref):
    x = x_ref[...]                                            # (bt, code) f32

    # encoder: Linear -> ReLU -> Linear
    h1 = jnp.dot(x, w1_ref[...], preferred_element_type=jnp.float32) + b1_ref[...]
    h1 = jnp.maximum(h1, 0.0)
    lat = jnp.dot(h1, w2_ref[...], preferred_element_type=jnp.float32) + b2_ref[...]

    # decoder: Linear -> ReLU -> Linear
    h2 = jnp.dot(lat, w3_ref[...], preferred_element_type=jnp.float32) + b3_ref[...]
    h2 = jnp.maximum(h2, 0.0)
    rec = jnp.dot(h2, w4_ref[...], preferred_element_type=jnp.float32) + b4_ref[...]

    # narrow (logical-width) stores: masked vst is cheap, HBM bytes are not
    lat_ref[...] = lat.astype(lat_ref.dtype)
    rec_ref[...] = rec.astype(rec_ref.dtype)


def _choose_batch_tile(Bp, *, cap=4096, min_steps=8, min_tile=1024):
    """Bp is a multiple of 8.

    - Bp <= cap: one full block (grid=(1,)) — best on single-TC v5e/v6e,
      negligible difference on v7x at these sizes.
    - Bp > cap: largest multiple-of-8 divisor of Bp <= target, where target
      tries to give >= min_steps grid steps (keeps both v7x TensorCores
      pipelined) while staying >= min_tile rows to amortize ~0.35us/step.
    Per-step footprint is ~160 B/row, so even 4096 rows double-buffered is
    well under the 32 MiB scoped VMEM default on every generation (incl. v7x).
    """
    if Bp <= cap:
        return Bp
    target = cap if Bp // cap >= min_steps else max(min_tile, Bp // min_steps)
    tile = target - target % 8
    while Bp % tile:
        tile -= 8
    return tile


def ae_forward(x, params, *, batch_tile=None):
    """x: [B, code_length] float32. params: transposed weights [in, out] + biases."""
    B, code_length = x.shape
    hidden = params["w1"].shape[1]
    embedding = params["w2"].shape[1]

    # pad batch (sublane dim) to a multiple of 8; feature dims stay logical
    Bp = (B + 7) // 8 * 8
    x_in = x if Bp == B else jnp.pad(x, ((0, Bp - B), (0, 0)))

    if batch_tile is None:
        batch_tile = _choose_batch_tile(Bp)
    assert Bp % batch_tile == 0
    assert batch_tile == Bp or batch_tile % 8 == 0

    f32 = jnp.float32
    w1 = params["w1"].astype(f32); b1 = params["b1"].reshape(1, -1).astype(f32)
    w2 = params["w2"].astype(f32); b2 = params["b2"].reshape(1, -1).astype(f32)
    w3 = params["w3"].astype(f32); b3 = params["b3"].reshape(1, -1).astype(f32)
    w4 = params["w4"].astype(f32); b4 = params["b4"].reshape(1, -1).astype(f32)

    # grid-resident weights/biases (block == full array, constant index map)
    const = lambda a: pl.BlockSpec(a.shape, lambda i: (0, 0))

    grid_spec = pltpu.PrefetchScalarGridSpec(
        num_scalar_prefetch=0,
        grid=(Bp // batch_tile,),
        in_specs=[
            pl.BlockSpec((batch_tile, code_length), lambda i: (i, 0)),  # x
            const(w1), const(b1),
            const(w2), const(b2),
            const(w3), const(b3),
            const(w4), const(b4),
        ],
        out_specs=[
            pl.BlockSpec((batch_tile, code_length), lambda i: (i, 0)),  # rec
            pl.BlockSpec((batch_tile, embedding), lambda i: (i, 0)),    # latent
        ],
    )

    rec, lat = pl.pallas_call(
        ae_kernel,
        out_shape=(
            jax.ShapeDtypeStruct((Bp, code_length), x.dtype),
            jax.ShapeDtypeStruct((Bp, embedding), x.dtype),
        ),
        grid_spec=grid_spec,
        compiler_params=pltpu.CompilerParams(
            dimension_semantics=("parallel",)),
    )(x_in, w1, b1, w2, b2, w3, b3, w4, b4)

    if Bp != B:  # crop batch padding only when it was added
        rec, lat = rec[:B], lat[:B]
    return rec, lat


def init_params(key, code_length, hidden_size, embedding_size):
    """PyTorch-like uniform(+/- 1/sqrt(fan_in)) init; weights stored transposed
    as [in_features, out_features] so the kernel computes x @ W.T + b."""
    def linear(key, fan_in, fan_out):
        kw, kb = jax.random.split(key)
        bound = 1.0 / jnp.sqrt(fan_in)
        w_t = jax.random.uniform(kw, (fan_in, fan_out), jnp.float32, -bound, bound)
        b = jax.random.uniform(kb, (fan_out,), jnp.float32, -bound, bound)
        return w_t, b

    k1, k2, k3, k4 = jax.random.split(key, 4)
    w1, b1 = linear(k1, code_length, hidden_size)      # encoder.0
    w2, b2 = linear(k2, hidden_size, embedding_size)   # encoder.2
    w3, b3 = linear(k3, embedding_size, hidden_size)   # decoder.0
    w4, b4 = linear(k4, hidden_size, code_length)      # decoder.2
    return dict(w1=w1, b1=b1, w2=w2, b2=b2, w3=w3, b3=b3, w4=w4, b4=b4)


def ae_reference(x, p):
    """Pure-f32 PyTorch-equivalent forward."""
    dot = lambda a, b: jnp.dot(a, b, preferred_element_type=jnp.float32,
                               precision=jax.lax.Precision.HIGHEST)
    h1 = jnp.maximum(dot(x, p["w1"]) + p["b1"], 0.0)
    latent = dot(h1, p["w2"]) + p["b2"]
    h2 = jnp.maximum(dot(latent, p["w3"]) + p["b3"], 0.0)
    rec = dot(h2, p["w4"]) + p["b4"]
    return rec, latent


if __name__ == "__main__":
    code_length, hidden_size, embedding_size = 16, 32, 8
    batch = 64

    key = jax.random.PRNGKey(0)
    k_params, k_x = jax.random.split(key)
    params = init_params(k_params, code_length, hidden_size, embedding_size)
    x = jax.random.normal(k_x, (batch, code_length), jnp.float32)

    rec_x, latent = ae_forward(x, params)
    jax.block_until_ready((rec_x, latent))

    assert rec_x.shape == (batch, code_length)
    assert latent.shape == (batch, embedding_size)

    rec_ref, lat_ref = ae_reference(x, params)
    assert jnp.allclose(rec_x, rec_ref, atol=1e-2, rtol=1e-2)
    assert jnp.allclose(latent, lat_ref, atol=1e-2, rtol=1e-2)

    print("KERNEL_OK")
</pallas_src>

<mosaic_0001>
module attributes {stable_mosaic.version = 11 : i64} {
  func.func @ae_kernel(%arg0: i32, %arg1: memref<64x16xf32, #tpu.memory_space<vmem>>, %arg2: memref<16x32xf32, #tpu.memory_space<vmem>>, %arg3: memref<1x32xf32, #tpu.memory_space<vmem>>, %arg4: memref<32x8xf32, #tpu.memory_space<vmem>>, %arg5: memref<1x8xf32, #tpu.memory_space<vmem>>, %arg6: memref<8x32xf32, #tpu.memory_space<vmem>>, %arg7: memref<1x32xf32, #tpu.memory_space<vmem>>, %arg8: memref<32x16xf32, #tpu.memory_space<vmem>>, %arg9: memref<1x16xf32, #tpu.memory_space<vmem>>, %arg10: memref<64x16xf32, #tpu.memory_space<vmem>>, %arg11: memref<64x8xf32, #tpu.memory_space<vmem>>) attributes {dimension_semantics = [#tpu.dimension_semantics<parallel>], iteration_bounds = array<i64: 1>, scalar_prefetch = 0 : i64, scratch_operands = 0 : i64, tpu.core_type = #tpu.core_type<tc>, window_params = [{transform_indices = @transform_0, window_bounds = array<i64: 64, 16>}, {pipeline_mode = #tpu.pipeline_mode<synchronous>, transform_indices = @transform_1, window_bounds = array<i64: 16, 32>}, {pipeline_mode = #tpu.pipeline_mode<synchronous>, transform_indices = @transform_2, window_bounds = array<i64: 1, 32>}, {pipeline_mode = #tpu.pipeline_mode<synchronous>, transform_indices = @transform_3, window_bounds = array<i64: 32, 8>}, {pipeline_mode = #tpu.pipeline_mode<synchronous>, transform_indices = @transform_4, window_bounds = array<i64: 1, 8>}, {pipeline_mode = #tpu.pipeline_mode<synchronous>, transform_indices = @transform_5, window_bounds = array<i64: 8, 32>}, {pipeline_mode = #tpu.pipeline_mode<synchronous>, transform_indices = @transform_6, window_bounds = array<i64: 1, 32>}, {pipeline_mode = #tpu.pipeline_mode<synchronous>, transform_indices = @transform_7, window_bounds = array<i64: 32, 16>}, {pipeline_mode = #tpu.pipeline_mode<synchronous>, transform_indices = @transform_8, window_bounds = array<i64: 1, 16>}, {transform_indices = @transform_9, window_bounds = array<i64: 64, 16>}, {transform_indices = @transform_10, window_bounds = array<i64: 64, 8>}]} {
    %c0 = arith.constant 0 : index
    %c0_0 = arith.constant 0 : index
    %0 = vector.load %arg1[%c0, %c0_0] : memref<64x16xf32, #tpu.memory_space<vmem>>, vector<64x16xf32>
    %c0_1 = arith.constant 0 : index
    %c0_2 = arith.constant 0 : index
    %1 = vector.load %arg2[%c0_1, %c0_2] : memref<16x32xf32, #tpu.memory_space<vmem>>, vector<16x32xf32>
    %cst = arith.constant dense<0.000000e+00> : vector<64x32xf32>
    %2 = tpu.matmul %0, %1, %cst {dimension_numbers = #tpu.dot_dimension_numbers<[1], [0], [0], [1], [0, 0, 1, 1], [], []>} : vector<64x16xf32>, vector<16x32xf32>, vector<64x32xf32> -> vector<64x32xf32>
    %c0_3 = arith.constant 0 : index
    %c0_4 = arith.constant 0 : index
    %3 = vector.load %arg3[%c0_3, %c0_4] : memref<1x32xf32, #tpu.memory_space<vmem>>, vector<1x32xf32>
    %4 = vector.broadcast %3 : vector<1x32xf32> to vector<64x32xf32>
    %5 = arith.addf %2, %4 : vector<64x32xf32>
    %cst_5 = arith.constant 0.000000e+00 : f32
    %6 = vector.broadcast %cst_5 : f32 to vector<64x32xf32>
    %7 = arith.maximumf %5, %6 : vector<64x32xf32>
    %c0_6 = arith.constant 0 : index
    %c0_7 = arith.constant 0 : index
    %8 = vector.load %arg4[%c0_6, %c0_7] : memref<32x8xf32, #tpu.memory_space<vmem>>, vector<32x8xf32>
    %cst_8 = arith.constant dense<0.000000e+00> : vector<64x8xf32>
    %9 = tpu.matmul %7, %8, %cst_8 {dimension_numbers = #tpu.dot_dimension_numbers<[1], [0], [0], [1], [0, 0, 1, 1], [], []>} : vector<64x32xf32>, vector<32x8xf32>, vector<64x8xf32> -> vector<64x8xf32>
    %c0_9 = arith.constant 0 : index
    %c0_10 = arith.constant 0 : index
    %10 = vector.load %arg5[%c0_9, %c0_10] : memref<1x8xf32, #tpu.memory_space<vmem>>, vector<1x8xf32>
    %11 = vector.broadcast %10 : vector<1x8xf32> to vector<64x8xf32>
    %12 = arith.addf %9, %11 : vector<64x8xf32>
    %c0_11 = arith.constant 0 : index
    %c0_12 = arith.constant 0 : index
    %13 = vector.load %arg6[%c0_11, %c0_12] : memref<8x32xf32, #tpu.memory_space<vmem>>, vector<8x32xf32>
    %cst_13 = arith.constant dense<0.000000e+00> : vector<64x32xf32>
    %14 = tpu.matmul %12, %13, %cst_13 {dimension_numbers = #tpu.dot_dimension_numbers<[1], [0], [0], [1], [0, 0, 1, 1], [], []>} : vector<64x8xf32>, vector<8x32xf32>, vector<64x32xf32> -> vector<64x32xf32>
    %c0_14 = arith.constant 0 : index
    %c0_15 = arith.constant 0 : index
    %15 = vector.load %arg7[%c0_14, %c0_15] : memref<1x32xf32, #tpu.memory_space<vmem>>, vector<1x32xf32>
    %16 = vector.broadcast %15 : vector<1x32xf32> to vector<64x32xf32>
    %17 = arith.addf %14, %16 : vector<64x32xf32>
    %cst_16 = arith.constant 0.000000e+00 : f32
    %18 = vector.broadcast %cst_16 : f32 to vector<64x32xf32>
    %19 = arith.maximumf %17, %18 : vector<64x32xf32>
    %c0_17 = arith.constant 0 : index
    %c0_18 = arith.constant 0 : index
    %20 = vector.load %arg8[%c0_17, %c0_18] : memref<32x16xf32, #tpu.memory_space<vmem>>, vector<32x16xf32>
    %cst_19 = arith.constant dense<0.000000e+00> : vector<64x16xf32>
    %21 = tpu.matmul %19, %20, %cst_19 {dimension_numbers = #tpu.dot_dimension_numbers<[1], [0], [0], [1], [0, 0, 1, 1], [], []>} : vector<64x32xf32>, vector<32x16xf32>, vector<64x16xf32> -> vector<64x16xf32>
    %c0_20 = arith.constant 0 : index
    %c0_21 = arith.constant 0 : index
    %22 = vector.load %arg9[%c0_20, %c0_21] : memref<1x16xf32, #tpu.memory_space<vmem>>, vector<1x16xf32>
    %23 = vector.broadcast %22 : vector<1x16xf32> to vector<64x16xf32>
    %24 = arith.addf %21, %23 : vector<64x16xf32>
    %c0_22 = arith.constant 0 : index
    %c0_23 = arith.constant 0 : index
    %25 = vector.load %arg11[%c0_22, %c0_23] : memref<64x8xf32, #tpu.memory_space<vmem>>, vector<64x8xf32>
    tpu.vector_store %arg11[%c0_22, %c0_23], %12 {strides = array<i32>} : memref<64x8xf32, #tpu.memory_space<vmem>>, vector<64x8xf32>,
    %c0_24 = arith.constant 0 : index
    %c0_25 = arith.constant 0 : index
    %26 = vector.load %arg10[%c0_24, %c0_25] : memref<64x16xf32, #tpu.memory_space<vmem>>, vector<64x16xf32>
    tpu.vector_store %arg10[%c0_24, %c0_25], %24 {strides = array<i32>} : memref<64x16xf32, #tpu.memory_space<vmem>>, vector<64x16xf32>,
    return
  }
  func.func @transform_0(%arg0: i32) -> (i32, i32) {
    %c0_i32 = arith.constant 0 : i32
    %c0_i32_0 = arith.constant 0 : i32
    return %arg0, %c0_i32 : i32, i32
  }
  func.func @transform_1(%arg0: i32) -> (i32, i32) {
    %c0_i32 = arith.constant 0 : i32
    %c0_i32_0 = arith.constant 0 : i32
    %c0_i32_1 = arith.constant 0 : i32
    return %c0_i32, %c0_i32_0 : i32, i32
  }
  func.func @transform_2(%arg0: i32) -> (i32, i32) {
    %c0_i32 = arith.constant 0 : i32
    %c0_i32_0 = arith.constant 0 : i32
    %c0_i32_1 = arith.constant 0 : i32
    return %c0_i32, %c0_i32_0 : i32, i32
  }
  func.func @transform_3(%arg0: i32) -> (i32, i32) {
    %c0_i32 = arith.constant 0 : i32
    %c0_i32_0 = arith.constant 0 : i32
    %c0_i32_1 = arith.constant 0 : i32
    return %c0_i32, %c0_i32_0 : i32, i32
  }
  func.func @transform_4(%arg0: i32) -> (i32, i32) {
    %c0_i32 = arith.constant 0 : i32
    %c0_i32_0 = arith.constant 0 : i32
    %c0_i32_1 = arith.constant 0 : i32
    return %c0_i32, %c0_i32_0 : i32, i32
  }
  func.func @transform_5(%arg0: i32) -> (i32, i32) {
    %c0_i32 = arith.constant 0 : i32
    %c0_i32_0 = arith.constant 0 : i32
    %c0_i32_1 = arith.constant 0 : i32
    return %c0_i32, %c0_i32_0 : i32, i32
  }
  func.func @transform_6(%arg0: i32) -> (i32, i32) {
    %c0_i32 = arith.constant 0 : i32
    %c0_i32_0 = arith.constant 0 : i32
    %c0_i32_1 = arith.constant 0 : i32
    return %c0_i32, %c0_i32_0 : i32, i32
  }
  func.func @transform_7(%arg0: i32) -> (i32, i32) {
    %c0_i32 = arith.constant 0 : i32
    %c0_i32_0 = arith.constant 0 : i32
    %c0_i32_1 = arith.constant 0 : i32
    return %c0_i32, %c0_i32_0 : i32, i32
  }
  func.func @transform_8(%arg0: i32) -> (i32, i32) {
    %c0_i32 = arith.constant 0 : i32
    %c0_i32_0 = arith.constant 0 : i32
    %c0_i32_1 = arith.constant 0 : i32
    return %c0_i32, %c0_i32_0 : i32, i32
  }
  func.func @transform_9(%arg0: i32) -> (i32, i32) {
    %c0_i32 = arith.constant 0 : i32
    %c0_i32_0 = arith.constant 0 : i32
    return %arg0, %c0_i32 : i32, i32
  }
  func.func @transform_10(%arg0: i32) -> (i32, i32) {
    %c0_i32 = arith.constant 0 : i32
    %c0_i32_0 = arith.constant 0 : i32
    return %arg0, %c0_i32 : i32, i32
  }
}

</mosaic_0001>

<llo_original>
// kernel: tpu_custom_call.1
$region0: #{tpu_custom_call.1}
  #allocation0 [shape = 'u32[]', space=smem, size = 0x4, offset = 0x4, fixed_abs, tag = 'smem constant byte address 0x4 - core index']
  #allocation1 [shape = 'u32[144,128]{1,0:T(1,128)}', space=vmem, size = 0x12000, scoped, tag = 'internal scratch']
  %s0 = inlined_call_operand.vmem [shape: f32[64,16], index: 0, kind: input, shape index: {}]
  %s1 = inlined_call_operand.vmem [shape: f32[16,32], index: 1, kind: input, shape index: {}]
  %s2 = inlined_call_operand.vmem [shape: f32[1,32], index: 2, kind: input, shape index: {}]
  %s3 = inlined_call_operand.vmem [shape: f32[32,8], index: 3, kind: input, shape index: {}]
  %s4 = inlined_call_operand.vmem [shape: f32[1,8], index: 4, kind: input, shape index: {}]
  %s5 = inlined_call_operand.vmem [shape: f32[8,32], index: 5, kind: input, shape index: {}]
  %s6 = inlined_call_operand.vmem [shape: f32[1,32], index: 6, kind: input, shape index: {}]
  %s7 = inlined_call_operand.vmem [shape: f32[32,16], index: 7, kind: input, shape index: {}]
  %s8 = inlined_call_operand.vmem [shape: f32[1,16], index: 8, kind: input, shape index: {}]
  %s9 = inlined_call_operand.vmem [shape: f32[64,16], index: 9, kind: output, shape index: {0}]
  %s10 = inlined_call_operand.vmem [shape: f32[64,8], index: 10, kind: output, shape index: {1}]
  %11 = xla_tuple %s9, %s10
  %s12 = sld [smem:[#allocation0]]
  $region54: #{tpu_custom_call.1} parent=0
    _
  %s14 = ssub.s32 1, %s12
  %s15 = scalar_select 0, %s14, %s12
  // Predicated region
  $region2: #{tpu_custom_call.1} parent=0 // pred_check
    _
  $region3: #{tpu_custom_call.1} parent=0 // pred_check_branch
    %17 = sbr.rel (0) target = $region5
  $region4: #{tpu_custom_call.1} parent=0 // pred_region
    _
  $region5: #{tpu_custom_call.1} parent=0 // pred_fallthru
    _
  // Predicated region
  $region6: #{tpu_custom_call.1} parent=0 // pred_check
    _
  $region7: #{tpu_custom_call.1} parent=0 // pred_check_branch
    %19 = sbr.rel (0) target = $region9
  $region8: #{tpu_custom_call.1} parent=0 // pred_region
    _
  $region9: #{tpu_custom_call.1} parent=0 // pred_fallthru
    _
  // Predicated region
  $region10: #{tpu_custom_call.1} parent=0 // pred_check
    _
  $region11: #{tpu_custom_call.1} parent=0 // pred_check_branch
    %21 = sbr.rel (0) target = $region13
  $region12: #{tpu_custom_call.1} parent=0 // pred_region
    _
  $region13: #{tpu_custom_call.1} parent=0 // pred_fallthru
    _
  // Predicated region
  $region14: #{tpu_custom_call.1} parent=0 // pred_check
    _
  $region15: #{tpu_custom_call.1} parent=0 // pred_check_branch
    %23 = sbr.rel (0) target = $region17
  $region16: #{tpu_custom_call.1} parent=0 // pred_region
    _
  $region17: #{tpu_custom_call.1} parent=0 // pred_fallthru
    _
  // Predicated region
  $region18: #{tpu_custom_call.1} parent=0 // pred_check
    _
  $region19: #{tpu_custom_call.1} parent=0 // pred_check_branch
    %25 = sbr.rel (0) target = $region21
  $region20: #{tpu_custom_call.1} parent=0 // pred_region
    _
  $region21: #{tpu_custom_call.1} parent=0 // pred_fallthru
    _
  // Predicated region
  $region22: #{tpu_custom_call.1} parent=0 // pred_check
    _
  $region23: #{tpu_custom_call.1} parent=0 // pred_check_branch
    %27 = sbr.rel (0) target = $region25
  $region24: #{tpu_custom_call.1} parent=0 // pred_region
    _
  $region25: #{tpu_custom_call.1} parent=0 // pred_fallthru
    _
  // Predicated region
  $region26: #{tpu_custom_call.1} parent=0 // pred_check
    _
  $region27: #{tpu_custom_call.1} parent=0 // pred_check_branch
    %29 = sbr.rel (0) target = $region29
  $region28: #{tpu_custom_call.1} parent=0 // pred_region
    _
  $region29: #{tpu_custom_call.1} parent=0 // pred_fallthru
    _
  // Predicated region
  $region30: #{tpu_custom_call.1} parent=0 // pred_check
    _
  $region31: #{tpu_custom_call.1} parent=0 // pred_check_branch
    %31 = sbr.rel (0) target = $region33
  $region32: #{tpu_custom_call.1} parent=0 // pred_region
    _
  $region33: #{tpu_custom_call.1} parent=0 // pred_fallthru
    _
  // Predicated region
  $region34: #{tpu_custom_call.1} parent=0 // pred_check
    _
  $region35: #{tpu_custom_call.1} parent=0 // pred_check_branch
    %33 = sbr.rel (0) target = $region37
  $region36: #{tpu_custom_call.1} parent=0 // pred_region
    _
  $region37: #{tpu_custom_call.1} parent=0 // pred_fallthru
    _
  %v34 = vld [vmem:[%s0] sm:$0xff]
  %v35 = vld [vmem:[%s0 + $0x8] sm:$0xff]
  %v36 = vld [vmem:[%s0 + $0x10] sm:$0xff]
  %v37 = vld [vmem:[%s0 + $0x18] sm:$0xff]
  %v38 = vld [vmem:[%s0 + $0x20] sm:$0xff]
  %v39 = vld [vmem:[%s0 + $0x28] sm:$0xff]
  %v40 = vld [vmem:[%s0 + $0x30] sm:$0xff]
  %v41 = vld [vmem:[%s0 + $0x38] sm:$0xff]
  %v42 = vld [vmem:[%s1] sm:$0xff]
  %v43 = vld [vmem:[%s1 + $0x8] sm:$0xff]
  %v44 = vld [vmem:[%s2] sm:$0x1]
  %v46 = vlaneseq
  %v47 = vshrl.u32 %v46, 7
  %v48 = vsub.s32 0, %v47
  %v49 = vrot.slane %v44, %v48
  %vm51 = vcmask 130048
  %v53 = vsel %vm51, %v34, 0
  %v56 = vsel %vm51, %v35, 0
  %v59 = vsel %vm51, %v36, 0
  %v62 = vsel %vm51, %v37, 0
  %v65 = vsel %vm51, %v38, 0
  %v68 = vsel %vm51, %v39, 0
  %v71 = vsel %vm51, %v40, 0
  %v74 = vsel %vm51, %v41, 0
  %76 = vmatprep.subr.mxu0 0.0
  %77 = vmatpush1.msra.mxu0 %v42
  %78 = vmatprep.subr.mxu0 0.0
  %79 = vmatpush1.msra.mxu0 %v43
  %80 = vmatprep.subr.mxu0 0.0
  %81 = vmatpush1.msra.mxu0 0.0
  %82 = vmatprep.subr.mxu0 0.0
  %83 = vmatpush1.msra.mxu0 0.0
  %84 = vmatprep.subr.mxu0 0.0
  %85 = vmatpush1.msra.mxu0 0.0
  %86 = vmatprep.subr.mxu0 0.0
  %87 = vmatpush1.msra.mxu0 0.0
  %88 = vmatprep.subr.mxu0 0.0
  %89 = vmatpush1.msra.mxu0 0.0
  %90 = vmatprep.subr.mxu0 0.0
  %91 = vmatpush1.msra.mxu0 0.0
  %92 = vmatprep.subr.mxu0 0.0
  %93 = vmatpush1.msra.mxu0 0.0
  %94 = vmatprep.subr.mxu0 0.0
  %95 = vmatpush1.msra.mxu0 0.0
  %96 = vmatprep.subr.mxu0 0.0
  %97 = vmatpush1.msra.mxu0 0.0
  %98 = vmatprep.subr.mxu0 0.0
  %99 = vmatpush1.msra.mxu0 0.0
  %100 = vmatprep.subr.mxu0 0.0
  %101 = vmatpush1.msra.mxu0 0.0
  %102 = vmatprep.subr.mxu0 0.0
  %103 = vmatpush1.msra.mxu0 0.0
  %104 = vmatprep.subr.mxu0 0.0
  %105 = vmatpush1.msra.mxu0 0.0
  %106 = vmatprep.subr.mxu0 0.0
  %107 = vmatpush1.msra.mxu0 0.0
  %108 = vmatprep.subr.mxu0 0.0
  %109 = vmatpush1.msra.mxu0 0.0
  %110 = vmatprep.subr.mxu0 0.0
  %111 = vmatpush1.msra.mxu0 0.0
  %112 = vmatprep.subr.mxu0 0.0
  %113 = vmatpush1.msra.mxu0 0.0
  %114 = vmatprep.subr.mxu0 0.0
  %115 = vmatpush1.msra.mxu0 0.0
  %116 = vmatprep.subr.mxu0 0.0
  %117 = vmatpush1.msra.mxu0 0.0
  %118 = vmatprep.subr.mxu0 0.0
  %119 = vmatpush1.msra.mxu0 0.0
  %120 = vmatprep.subr.mxu0 0.0
  %121 = vmatpush1.msra.mxu0 0.0
  %122 = vmatprep.subr.mxu0 0.0
  %123 = vmatpush1.msra.mxu0 0.0
  %124 = vmatprep.subr.mxu0 0.0
  %125 = vmatpush1.msra.mxu0 0.0
  %126 = vmatprep.subr.mxu0 0.0
  %127 = vmatpush1.msra.mxu0 0.0
  %128 = vmatprep.subr.mxu0 0.0
  %129 = vmatpush1.msra.mxu0 0.0
  %130 = vmatprep.subr.mxu0 0.0
  %131 = vmatpush1.msra.mxu0 0.0
  %132 = vmatprep.subr.mxu0 0.0
  %133 = vmatpush1.msra.mxu0 0.0
  %134 = vmatprep.subr.mxu0 0.0
  %135 = vmatpush1.msra.mxu0 0.0
  %136 = vmatprep.subr.mxu0 0.0
  %137 = vmatpush1.msra.mxu0 0.0
  %138 = vmatprep.subr.mxu0 0.0
  %139 = vmatpush1.msra.mxu0 0.0
  %140 = vmatprep.mubr.f32.mxu0 0.0
  %141 = vmatmul.mubr.f32.gmra.mrb[0].mxu0 %v53
  %v142 = vpop.f32.mrb[0].mxu0
  %v143 = vadd.f32 %v49, %v142
  %v144 = vpop.f32.mrb[0].mxu0
  %145 = vmatprep.mubr.f32.mxu0 0.0
  %146 = vmatmul.mubr.f32.gmra.mrb[0].mxu0 %v56
  %v147 = vpop.f32.mrb[0].mxu0
  %v148 = vadd.f32 %v49, %v147
  %v149 = vpop.f32.mrb[0].mxu0
  %150 = vmatprep.mubr.f32.mxu0 0.0
  %151 = vmatmul.mubr.f32.gmra.mrb[0].mxu0 %v59
  %v152 = vpop.f32.mrb[0].mxu0
  %v153 = vadd.f32 %v49, %v152
  %v154 = vpop.f32.mrb[0].mxu0
  %155 = vmatprep.mubr.f32.mxu0 0.0
  %156 = vmatmul.mubr.f32.gmra.mrb[0].mxu0 %v62
  %v157 = vpop.f32.mrb[0].mxu0
  %v158 = vadd.f32 %v49, %v157
  %v159 = vpop.f32.mrb[0].mxu0
  %160 = vmatprep.mubr.f32.mxu0 0.0
  %161 = vmatmul.mubr.f32.gmra.mrb[0].mxu0 %v65
  %v162 = vpop.f32.mrb[0].mxu0
  %v163 = vadd.f32 %v49, %v162
  %v164 = vpop.f32.mrb[0].mxu0
  %165 = vmatprep.mubr.f32.mxu0 0.0
  %166 = vmatmul.mubr.f32.gmra.mrb[0].mxu0 %v68
  %v167 = vpop.f32.mrb[0].mxu0
  %v168 = vadd.f32 %v49, %v167
  %v169 = vpop.f32.mrb[0].mxu0
  %170 = vmatprep.mubr.f32.mxu0 0.0
  %171 = vmatmul.mubr.f32.gmra.mrb[0].mxu0 %v71
  %v172 = vpop.f32.mrb[0].mxu0
  %v173 = vadd.f32 %v49, %v172
  %v174 = vpop.f32.mrb[0].mxu0
  %175 = vmatprep.mubr.f32.mxu0 0.0
  %176 = vmatmul.mubr.f32.gmra.mrb[0].mxu0 %v74
  %v177 = vpop.f32.mrb[0].mxu0
  %v178 = vadd.f32 %v49, %v177
  %v179 = vpop.f32.mrb[0].mxu0
  %180 = vdwg.mxu0
  %v181 = vmax.f32 %v143, 0.0
  %v182 = vmax.f32 %v148, 0.0
  %v183 = vmax.f32 %v153, 0.0
  %v184 = vmax.f32 %v158, 0.0
  %v185 = vmax.f32 %v163, 0.0
  %v186 = vmax.f32 %v168, 0.0
  %v187 = vmax.f32 %v173, 0.0
  %v188 = vmax.f32 %v178, 0.0
  %v189 = vld [vmem:[%s3] sm:$0xff]
  %v190 = vld [vmem:[%s3 + $0x8] sm:$0xff]
  %v191 = vld [vmem:[%s3 + $0x10] sm:$0xff]
  %v192 = vld [vmem:[%s3 + $0x18] sm:$0xff]
  %v193 = vld [vmem:[%s4] sm:$0x1]
  %v195 = vlaneseq
  %v196 = vshrl.u32 %v195, 7
  %v197 = vsub.s32 0, %v196
  %v198 = vrot.slane %v193, %v197
  %vm200 = vcmask 261120
  %v202 = vsel %vm200, %v181, 0
  %v205 = vsel %vm200, %v182, 0
  %v208 = vsel %vm200, %v183, 0
  %v211 = vsel %vm200, %v184, 0
  %v214 = vsel %vm200, %v185, 0
  %v217 = vsel %vm200, %v186, 0
  %v220 = vsel %vm200, %v187, 0
  %v223 = vsel %vm200, %v188, 0
  %225 = vmatprep.subr.mxu0 0.0
  %226 = vmatpush1.msra.mxu0 %v189
  %227 = vmatprep.subr.mxu0 0.0
  %228 = vmatpush1.msra.mxu0 %v190
  %229 = vmatprep.subr.mxu0 0.0
  %230 = vmatpush1.msra.mxu0 %v191
  %231 = vmatprep.subr.mxu0 0.0
  %232 = vmatpush1.msra.mxu0 %v192
  %233 = vmatprep.subr.mxu0 0.0
  %234 = vmatpush1.msra.mxu0 0.0
  %235 = vmatprep.subr.mxu0 0.0
  %236 = vmatpush1.msra.mxu0 0.0
  %237 = vmatprep.subr.mxu0 0.0
  %238 = vmatpush1.msra.mxu0 0.0
  %239 = vmatprep.subr.mxu0 0.0
  %240 = vmatpush1.msra.mxu0 0.0
  %241 = vmatprep.subr.mxu0 0.0
  %242 = vmatpush1.msra.mxu0 0.0
  %243 = vmatprep.subr.mxu0 0.0
  %244 = vmatpush1.msra.mxu0 0.0
  %245 = vmatprep.subr.mxu0 0.0
  %246 = vmatpush1.msra.mxu0 0.0
  %247 = vmatprep.subr.mxu0 0.0
  %248 = vmatpush1.msra.mxu0 0.0
  %249 = vmatprep.subr.mxu0 0.0
  %250 = vmatpush1.msra.mxu0 0.0
  %251 = vmatprep.subr.mxu0 0.0
  %252 = vmatpush1.msra.mxu0 0.0
  %253 = vmatprep.subr.mxu0 0.0
  %254 = vmatpush1.msra.mxu0 0.0
  %255 = vmatprep.subr.mxu0 0.0
  %256 = vmatpush1.msra.mxu0 0.0
  %257 = vmatprep.subr.mxu0 0.0
  %258 = vmatpush1.msra.mxu0 0.0
  %259 = vmatprep.subr.mxu0 0.0
  %260 = vmatpush1.msra.mxu0 0.0
  %261 = vmatprep.subr.mxu0 0.0
  %262 = vmatpush1.msra.mxu0 0.0
  %263 = vmatprep.subr.mxu0 0.0
  %264 = vmatpush1.msra.mxu0 0.0
  %265 = vmatprep.subr.mxu0 0.0
  %266 = vmatpush1.msra.mxu0 0.0
  %267 = vmatprep.subr.mxu0 0.0
  %268 = vmatpush1.msra.mxu0 0.0
  %269 = vmatprep.subr.mxu0 0.0
  %270 = vmatpush1.msra.mxu0 0.0
  %271 = vmatprep.subr.mxu0 0.0
  %272 = vmatpush1.msra.mxu0 0.0
  %273 = vmatprep.subr.mxu0 0.0
  %274 = vmatpush1.msra.mxu0 0.0
  %275 = vmatprep.subr.mxu0 0.0
  %276 = vmatpush1.msra.mxu0 0.0
  %277 = vmatprep.subr.mxu0 0.0
  %278 = vmatpush1.msra.mxu0 0.0
  %279 = vmatprep.subr.mxu0 0.0
  %280 = vmatpush1.msra.mxu0 0.0
  %281 = vmatprep.subr.mxu0 0.0
  %282 = vmatpush1.msra.mxu0 0.0
  %283 = vmatprep.subr.mxu0 0.0
  %284 = vmatpush1.msra.mxu0 0.0
  %285 = vmatprep.subr.mxu0 0.0
  %286 = vmatpush1.msra.mxu0 0.0
  %287 = vmatprep.subr.mxu0 0.0
  %288 = vmatpush1.msra.mxu0 0.0
  %289 = vmatprep.mubr.f32.mxu0 0.0
  %290 = vmatmul.mubr.f32.gmra.mrb[0].mxu0 %v202
  %v291 = vpop.f32.mrb[0].mxu0
  %v292 = vadd.f32 %v198, %v291
  %v293 = vpop.f32.mrb[0].mxu0
  %294 = vmatprep.mubr.f32.mxu0 0.0
  %295 = vmatmul.mubr.f32.gmra.mrb[0].mxu0 %v205
  %v296 = vpop.f32.mrb[0].mxu0
  %v297 = vadd.f32 %v198, %v296
  %v298 = vpop.f32.mrb[0].mxu0
  %299 = vmatprep.mubr.f32.mxu0 0.0
  %300 = vmatmul.mubr.f32.gmra.mrb[0].mxu0 %v208
  %v301 = vpop.f32.mrb[0].mxu0
  %v302 = vadd.f32 %v198, %v301
  %v303 = vpop.f32.mrb[0].mxu0
  %304 = vmatprep.mubr.f32.mxu0 0.0
  %305 = vmatmul.mubr.f32.gmra.mrb[0].mxu0 %v211
  %v306 = vpop.f32.mrb[0].mxu0
  %v307 = vadd.f32 %v198, %v306
  %v308 = vpop.f32.mrb[0].mxu0
  %309 = vmatprep.mubr.f32.mxu0 0.0
  %310 = vmatmul.mubr.f32.gmra.mrb[0].mxu0 %v214
  %v311 = vpop.f32.mrb[0].mxu0
  %v312 = vadd.f32 %v198, %v311
  %v313 = vpop.f32.mrb[0].mxu0
  %314 = vmatprep.mubr.f32.mxu0 0.0
  %315 = vmatmul.mubr.f32.gmra.mrb[0].mxu0 %v217
  %v316 = vpop.f32.mrb[0].mxu0
  %v317 = vadd.f32 %v198, %v316
  %v318 = vpop.f32.mrb[0].mxu0
  %319 = vmatprep.mubr.f32.mxu0 0.0
  %320 = vmatmul.mubr.f32.gmra.mrb[0].mxu0 %v220
  %v321 = vpop.f32.mrb[0].mxu0
  %v322 = vadd.f32 %v198, %v321
  %v323 = vpop.f32.mrb[0].mxu0
  %324 = vmatprep.mubr.f32.mxu0 0.0
  %325 = vmatmul.mubr.f32.gmra.mrb[0].mxu0 %v223
  %v326 = vpop.f32.mrb[0].mxu0
  %v327 = vadd.f32 %v198, %v326
  %v328 = vpop.f32.mrb[0].mxu0
  %329 = vdwg.mxu0
  %v330 = vld [vmem:[%s5] sm:$0xff]
  %v331 = vld [vmem:[%s6] sm:$0x1]
  %v333 = vlaneseq
  %v334 = vshrl.u32 %v333, 7
  %v335 = vsub.s32 0, %v334
  %v336 = vrot.slane %v331, %v335
  %vm338 = vcmask 64512
  %v340 = vsel %vm338, %v292, 0
  %v343 = vsel %vm338, %v297, 0
  %v346 = vsel %vm338, %v302, 0
  %v349 = vsel %vm338, %v307, 0
  %v352 = vsel %vm338, %v312, 0
  %v355 = vsel %vm338, %v317, 0
  %v358 = vsel %vm338, %v322, 0
  %v361 = vsel %vm338, %v327, 0
  %363 = vmatprep.subr.mxu0 0.0
  %364 = vmatpush1.msra.mxu0 %v330
  %365 = vmatprep.subr.mxu0 0.0
  %366 = vmatpush1.msra.mxu0 0.0
  %367 = vmatprep.subr.mxu0 0.0
  %368 = vmatpush1.msra.mxu0 0.0
  %369 = vmatprep.subr.mxu0 0.0
  %370 = vmatpush1.msra.mxu0 0.0
  %371 = vmatprep.subr.mxu0 0.0
  %372 = vmatpush1.msra.mxu0 0.0
  %373 = vmatprep.subr.mxu0 0.0
  %374 = vmatpush1.msra.mxu0 0.0
  %375 = vmatprep.subr.mxu0 0.0
  %376 = vmatpush1.msra.mxu0 0.0
  %377 = vmatprep.subr.mxu0 0.0
  %378 = vmatpush1.msra.mxu0 0.0
  %379 = vmatprep.subr.mxu0 0.0
  %380 = vmatpush1.msra.mxu0 0.0
  %381 = vmatprep.subr.mxu0 0.0
  %382 = vmatpush1.msra.mxu0 0.0
  %383 = vmatprep.subr.mxu0 0.0
  %384 = vmatpush1.msra.mxu0 0.0
  %385 = vmatprep.subr.mxu0 0.0
  %386 = vmatpush1.msra.mxu0 0.0
  %387 = vmatprep.subr.mxu0 0.0
  %388 = vmatpush1.msra.mxu0 0.0
  %389 = vmatprep.subr.mxu0 0.0
  %390 = vmatpush1.msra.mxu0 0.0
  %391 = vmatprep.subr.mxu0 0.0
  %392 = vmatpush1.msra.mxu0 0.0
  %393 = vmatprep.subr.mxu0 0.0
  %394 = vmatpush1.msra.mxu0 0.0
  %395 = vmatprep.subr.mxu0 0.0
  %396 = vmatpush1.msra.mxu0 0.0
  %397 = vmatprep.subr.mxu0 0.0
  %398 = vmatpush1.msra.mxu0 0.0
  %399 = vmatprep.subr.mxu0 0.0
  %400 = vmatpush1.msra.mxu0 0.0
  %401 = vmatprep.subr.mxu0 0.0
  %402 = vmatpush1.msra.mxu0 0.0
  %403 = vmatprep.subr.mxu0 0.0
  %404 = vmatpush1.msra.mxu0 0.0
  %405 = vmatprep.subr.mxu0 0.0
  %406 = vmatpush1.msra.mxu0 0.0
  %407 = vmatprep.subr.mxu0 0.0
  %408 = vmatpush1.msra.mxu0 0.0
  %409 = vmatprep.subr.mxu0 0.0
  %410 = vmatpush1.msra.mxu0 0.0
  %411 = vmatprep.subr.mxu0 0.0
  %412 = vmatpush1.msra.mxu0 0.0
  %413 = vmatprep.subr.mxu0 0.0
  %414 = vmatpush1.msra.mxu0 0.0
  %415 = vmatprep.subr.mxu0 0.0
  %416 = vmatpush1.msra.mxu0 0.0
  %417 = vmatprep.subr.mxu0 0.0
  %418 = vmatpush1.msra.mxu0 0.0
  %419 = vmatprep.subr.mxu0 0.0
  %420 = vmatpush1.msra.mxu0 0.0
  %421 = vmatprep.subr.mxu0 0.0
  %422 = vmatpush1.msra.mxu0 0.0
  %423 = vmatprep.subr.mxu0 0.0
  %424 = vmatpush1.msra.mxu0 0.0
  %425 = vmatprep.subr.mxu0 0.0
  %426 = vmatpush1.msra.mxu0 0.0
  %427 = vmatprep.mubr.f32.mxu0 0.0
  %428 = vmatmul.mubr.f32.gmra.mrb[0].mxu0 %v340
  %v429 = vpop.f32.mrb[0].mxu0
  %v430 = vadd.f32 %v336, %v429
  %v431 = vpop.f32.mrb[0].mxu0
  %432 = vmatprep.mubr.f32.mxu0 0.0
  %433 = vmatmul.mubr.f32.gmra.mrb[0].mxu0 %v343
  %v434 = vpop.f32.mrb[0].mxu0
  %v435 = vadd.f32 %v336, %v434
  %v436 = vpop.f32.mrb[0].mxu0
  %437 = vmatprep.mubr.f32.mxu0 0.0
  %438 = vmatmul.mubr.f32.gmra.mrb[0].mxu0 %v346
  %v439 = vpop.f32.mrb[0].mxu0
  %v440 = vadd.f32 %v336, %v439
  %v441 = vpop.f32.mrb[0].mxu0
  %442 = vmatprep.mubr.f32.mxu0 0.0
  %443 = vmatmul.mubr.f32.gmra.mrb[0].mxu0 %v349
  %v444 = vpop.f32.mrb[0].mxu0
  %v445 = vadd.f32 %v336, %v444
  %v446 = vpop.f32.mrb[0].mxu0
  %447 = vmatprep.mubr.f32.mxu0 0.0
  %448 = vmatmul.mubr.f32.gmra.mrb[0].mxu0 %v352
  %v449 = vpop.f32.mrb[0].mxu0
  %v450 = vadd.f32 %v336, %v449
  %v451 = vpop.f32.mrb[0].mxu0
  %452 = vmatprep.mubr.f32.mxu0 0.0
  %453 = vmatmul.mubr.f32.gmra.mrb[0].mxu0 %v355
  %v454 = vpop.f32.mrb[0].mxu0
  %v455 = vadd.f32 %v336, %v454
  %v456 = vpop.f32.mrb[0].mxu0
  %457 = vmatprep.mubr.f32.mxu0 0.0
  %458 = vmatmul.mubr.f32.gmra.mrb[0].mxu0 %v358
  %v459 = vpop.f32.mrb[0].mxu0
  %v460 = vadd.f32 %v336, %v459
  %v461 = vpop.f32.mrb[0].mxu0
  %462 = vmatprep.mubr.f32.mxu0 0.0
  %463 = vmatmul.mubr.f32.gmra.mrb[0].mxu0 %v361
  %v464 = vpop.f32.mrb[0].mxu0
  %v465 = vadd.f32 %v336, %v464
  %v466 = vpop.f32.mrb[0].mxu0
  %467 = vdwg.mxu0
  %v468 = vmax.f32 %v430, 0.0
  %v469 = vmax.f32 %v435, 0.0
  %v470 = vmax.f32 %v440, 0.0
  %v471 = vmax.f32 %v445, 0.0
  %v472 = vmax.f32 %v450, 0.0
  %v473 = vmax.f32 %v455, 0.0
  %v474 = vmax.f32 %v460, 0.0
  %v475 = vmax.f32 %v465, 0.0
  %v476 = vld [vmem:[%s7] sm:$0xff]
  %v477 = vld [vmem:[%s7 + $0x8] sm:$0xff]
  %v478 = vld [vmem:[%s7 + $0x10] sm:$0xff]
  %v479 = vld [vmem:[%s7 + $0x18] sm:$0xff]
  %v480 = vld [vmem:[%s8] sm:$0x1]
  %v482 = vlaneseq
  %v483 = vshrl.u32 %v482, 7
  %v484 = vsub.s32 0, %v483
  %v485 = vrot.slane %v480, %v484
  %v488 = vsel %vm200, %v468, 0
  %v491 = vsel %vm200, %v469, 0
  %v494 = vsel %vm200, %v470, 0
  %v497 = vsel %vm200, %v471, 0
  %v500 = vsel %vm200, %v472, 0
  %v503 = vsel %vm200, %v473, 0
  %v506 = vsel %vm200, %v474, 0
  %v509 = vsel %vm200, %v475, 0
  %511 = vmatprep.subr.mxu0 0.0
  %512 = vmatpush1.msra.mxu0 %v476
  %513 = vmatprep.subr.mxu0 0.0
  %514 = vmatpush1.msra.mxu0 %v477
  %515 = vmatprep.subr.mxu0 0.0
  %516 = vmatpush1.msra.mxu0 %v478
  %517 = vmatprep.subr.mxu0 0.0
  %518 = vmatpush1.msra.mxu0 %v479
  %519 = vmatprep.subr.mxu0 0.0
  %520 = vmatpush1.msra.mxu0 0.0
  %521 = vmatprep.subr.mxu0 0.0
  %522 = vmatpush1.msra.mxu0 0.0
  %523 = vmatprep.subr.mxu0 0.0
  %524 = vmatpush1.msra.mxu0 0.0
  %525 = vmatprep.subr.mxu0 0.0
  %526 = vmatpush1.msra.mxu0 0.0
  %527 = vmatprep.subr.mxu0 0.0
  %528 = vmatpush1.msra.mxu0 0.0
  %529 = vmatprep.subr.mxu0 0.0
  %530 = vmatpush1.msra.mxu0 0.0
  %531 = vmatprep.subr.mxu0 0.0
  %532 = vmatpush1.msra.mxu0 0.0
  %533 = vmatprep.subr.mxu0 0.0
  %534 = vmatpush1.msra.mxu0 0.0
  %535 = vmatprep.subr.mxu0 0.0
  %536 = vmatpush1.msra.mxu0 0.0
  %537 = vmatprep.subr.mxu0 0.0
  %538 = vmatpush1.msra.mxu0 0.0
  %539 = vmatprep.subr.mxu0 0.0
  %540 = vmatpush1.msra.mxu0 0.0
  %541 = vmatprep.subr.mxu0 0.0
  %542 = vmatpush1.msra.mxu0 0.0
  %543 = vmatprep.subr.mxu0 0.0
  %544 = vmatpush1.msra.mxu0 0.0
  %545 = vmatprep.subr.mxu0 0.0
  %546 = vmatpush1.msra.mxu0 0.0
  %547 = vmatprep.subr.mxu0 0.0
  %548 = vmatpush1.msra.mxu0 0.0
  %549 = vmatprep.subr.mxu0 0.0
  %550 = vmatpush1.msra.mxu0 0.0
  %551 = vmatprep.subr.mxu0 0.0
  %552 = vmatpush1.msra.mxu0 0.0
  %553 = vmatprep.subr.mxu0 0.0
  %554 = vmatpush1.msra.mxu0 0.0
  %555 = vmatprep.subr.mxu0 0.0
  %556 = vmatpush1.msra.mxu0 0.0
  %557 = vmatprep.subr.mxu0 0.0
  %558 = vmatpush1.msra.mxu0 0.0
  %559 = vmatprep.subr.mxu0 0.0
  %560 = vmatpush1.msra.mxu0 0.0
  %561 = vmatprep.subr.mxu0 0.0
  %562 = vmatpush1.msra.mxu0 0.0
  %563 = vmatprep.subr.mxu0 0.0
  %564 = vmatpush1.msra.mxu0 0.0
  %565 = vmatprep.subr.mxu0 0.0
  %566 = vmatpush1.msra.mxu0 0.0
  %567 = vmatprep.subr.mxu0 0.0
  %568 = vmatpush1.msra.mxu0 0.0
  %569 = vmatprep.subr.mxu0 0.0
  %570 = vmatpush1.msra.mxu0 0.0
  %571 = vmatprep.subr.mxu0 0.0
  %572 = vmatpush1.msra.mxu0 0.0
  %573 = vmatprep.subr.mxu0 0.0
  %574 = vmatpush1.msra.mxu0 0.0
  %575 = vmatprep.mubr.f32.mxu0 0.0
  %576 = vmatmul.mubr.f32.gmra.mrb[0].mxu0 %v488
  %v577 = vpop.f32.mrb[0].mxu0
  %v578 = vadd.f32 %v485, %v577
  %v579 = vpop.f32.mrb[0].mxu0
  %580 = vmatprep.mubr.f32.mxu0 0.0
  %581 = vmatmul.mubr.f32.gmra.mrb[0].mxu0 %v491
  %v582 = vpop.f32.mrb[0].mxu0
  %v583 = vadd.f32 %v485, %v582
  %v584 = vpop.f32.mrb[0].mxu0
  %585 = vmatprep.mubr.f32.mxu0 0.0
  %586 = vmatmul.mubr.f32.gmra.mrb[0].mxu0 %v494
  %v587 = vpop.f32.mrb[0].mxu0
  %v588 = vadd.f32 %v485, %v587
  %v589 = vpop.f32.mrb[0].mxu0
  %590 = vmatprep.mubr.f32.mxu0 0.0
  %591 = vmatmul.mubr.f32.gmra.mrb[0].mxu0 %v497
  %v592 = vpop.f32.mrb[0].mxu0
  %v593 = vadd.f32 %v485, %v592
  %v594 = vpop.f32.mrb[0].mxu0
  %595 = vmatprep.mubr.f32.mxu0 0.0
  %596 = vmatmul.mubr.f32.gmra.mrb[0].mxu0 %v500
  %v597 = vpop.f32.mrb[0].mxu0
  %v598 = vadd.f32 %v485, %v597
  %v599 = vpop.f32.mrb[0].mxu0
  %600 = vmatprep.mubr.f32.mxu0 0.0
  %601 = vmatmul.mubr.f32.gmra.mrb[0].mxu0 %v503
  %v602 = vpop.f32.mrb[0].mxu0
  %v603 = vadd.f32 %v485, %v602
  %v604 = vpop.f32.mrb[0].mxu0
  %605 = vmatprep.mubr.f32.mxu0 0.0
  %606 = vmatmul.mubr.f32.gmra.mrb[0].mxu0 %v506
  %v607 = vpop.f32.mrb[0].mxu0
  %v608 = vadd.f32 %v485, %v607
  %v609 = vpop.f32.mrb[0].mxu0
  %610 = vmatprep.mubr.f32.mxu0 0.0
  %611 = vmatmul.mubr.f32.gmra.mrb[0].mxu0 %v509
  %v612 = vpop.f32.mrb[0].mxu0
  %v613 = vadd.f32 %v485, %v612
  %v614 = vpop.f32.mrb[0].mxu0
  %615 = vdwg.mxu0
  %616 = vst.msk [vmem:[%s10] sm:$0xff] %vm338, %v292
  %617 = vst.msk [vmem:[%s10 + $0x8] sm:$0xff] %vm338, %v297
  %618 = vst.msk [vmem:[%s10 + $0x10] sm:$0xff] %vm338, %v302
  %619 = vst.msk [vmem:[%s10 + $0x18] sm:$0xff] %vm338, %v307
  %620 = vst.msk [vmem:[%s10 + $0x20] sm:$0xff] %vm338, %v312
  %621 = vst.msk [vmem:[%s10 + $0x28] sm:$0xff] %vm338, %v317
  %622 = vst.msk [vmem:[%s10 + $0x30] sm:$0xff] %vm338, %v322
  %623 = vst.msk [vmem:[%s10 + $0x38] sm:$0xff] %vm338, %v327
  %624 = vst.msk [vmem:[%s9] sm:$0xff] %vm51, %v578
  %625 = vst.msk [vmem:[%s9 + $0x8] sm:$0xff] %vm51, %v583
  %626 = vst.msk [vmem:[%s9 + $0x10] sm:$0xff] %vm51, %v588
  %627 = vst.msk [vmem:[%s9 + $0x18] sm:$0xff] %vm51, %v593
  %628 = vst.msk [vmem:[%s9 + $0x20] sm:$0xff] %vm51, %v598
  %629 = vst.msk [vmem:[%s9 + $0x28] sm:$0xff] %vm51, %v603
  %630 = vst.msk [vmem:[%s9 + $0x30] sm:$0xff] %vm51, %v608
  %631 = vst.msk [vmem:[%s9 + $0x38] sm:$0xff] %vm51, %v613
  // Predicated region
  $region38: #{tpu_custom_call.1} parent=0 // pred_check
    _
  $region39: #{tpu_custom_call.1} parent=0 // pred_check_branch
    %633 = sbr.rel (0) target = $region41
  $region40: #{tpu_custom_call.1} parent=0 // pred_region
    _
  $region41: #{tpu_custom_call.1} parent=0 // pred_fallthru
    _
  // Predicated region
  $region42: #{tpu_custom_call.1} parent=0 // pred_check
    _
  $region43: #{tpu_custom_call.1} parent=0 // pred_check_branch
    %635 = sbr.rel (0) target = $region45
  $region44: #{tpu_custom_call.1} parent=0 // pred_region
    _
  $region45: #{tpu_custom_call.1} parent=0 // pred_fallthru
    _
  // Predicated region
  $region46: #{tpu_custom_call.1} parent=0 // pred_check
    _
  $region47: #{tpu_custom_call.1} parent=0 // pred_check_branch
    %637 = sbr.rel (0) target = $region49
  $region48: #{tpu_custom_call.1} parent=0 // pred_region
    _
  $region49: #{tpu_custom_call.1} parent=0 // pred_fallthru
    _
  // Predicated region
  $region50: #{tpu_custom_call.1} parent=0 // pred_check
    _
  $region51: #{tpu_custom_call.1} parent=0 // pred_check_branch
    %639 = sbr.rel (0) target = $region53
  $region52: #{tpu_custom_call.1} parent=0 // pred_region
    _
  $region53: #{tpu_custom_call.1} parent=0 // pred_fallthru
    _

</llo_original>
